<compile_context>
chip_gen: v7x
topology: tpu7x:2x2x1
jax: 0.10.0
libtpu: 0.0.40
codegen_flags: <defaults>
</compile_context>

<pallas_src>
import numpy as np
import jax
import jax.numpy as jnp
from jax import lax
from jax.experimental import pallas as pl
from jax.experimental.pallas import tpu as pltpu


# ---------------------------------------------------------------------------
# pltpu.roll direction probe (one tiny kernel, cached).  We need
# rolled[i] == flag[i - d]; the probe pins the sign convention so the
# host-built masks always pair with the right rolled lanes.
# ---------------------------------------------------------------------------
_ROLL_SIGN = {}


def _detect_roll_sign():
    if "sign" in _ROLL_SIGN:
        return _ROLL_SIGN["sign"]

    def probe(x_ref, o_ref):
        o_ref[...] = pltpu.roll(x_ref[...], 1, axis=1)

    x = jnp.arange(128, dtype=jnp.float32).reshape(1, 128)
    out = pl.pallas_call(
        probe,
        out_shape=jax.ShapeDtypeStruct((1, 128), jnp.float32),
        in_specs=[pl.BlockSpec(memory_space=pltpu.MemorySpace.VMEM)],
        out_specs=pl.BlockSpec(memory_space=pltpu.MemorySpace.VMEM),
    )(x)
    v = float(np.asarray(jax.block_until_ready(out))[0, 0])
    if abs(v - 127.0) < 0.5:        # np.roll semantics: out[i] = x[i - shift]
        sign = 1
    elif abs(v - 1.0) < 0.5:        # flipped semantics: out[i] = x[i + shift]
        sign = -1
    else:
        raise RuntimeError(f"unexpected pltpu.roll semantics (probe value {v})")
    _ROLL_SIGN["sign"] = sign
    return sign


# ---------------------------------------------------------------------------
# Host-side O(E) graph preprocessing (pure integer bookkeeping).
# ---------------------------------------------------------------------------
def build_slot_sources(edge_index_np, n, grid_size):
    """Transcription of TransitionLayer.aggregate's slot logic.

    Returns slot_src (N, 2) int32: source node whose argmax lands in each slot
    (-1 = empty).  Assignment semantics => last edge (in edge order) wins.
    """
    src = np.asarray(edge_index_np[0]).astype(np.int64)
    dst = np.asarray(edge_index_np[1]).astype(np.int64)
    slot_src = np.full((n, 2), -1, dtype=np.int32)
    counts = np.zeros(n, dtype=np.int64)
    for e in range(src.shape[0]):
        d = int(dst[e])
        if d % grid_size == 0:
            slot = 1
        elif d % grid_size == grid_size - 1:
            slot = 0
        else:
            slot = int(counts[d])
            counts[d] += 1
            if slot > 1:
                # TODO(synk): PyTorch would raise (out-of-bounds slot) if an
                #             interior node receives >2 edges; extras dropped.
                continue
        slot_src[d, slot] = int(src[e])
    return slot_src


def build_gather_tables(edge_index_np, n, grid_size, n_pad):
    """Fold slot_src into (deltas, masks) for the in-kernel roll+mask gather.

    deltas : sorted list of distinct (dst - src) lane shifts (static ints)
    masks  : (2*len(deltas), n_pad) f32; row 2*j+s is 1 where slot s of node i
             sources from node i - deltas[j].
    """
    slot_src = build_slot_sources(edge_index_np, n, grid_size)
    deltas = sorted({int(i - slot_src[i, s])
                     for i in range(n) for s in range(2) if slot_src[i, s] >= 0})
    if not deltas:
        deltas = [0]
    masks = np.zeros((2 * len(deltas), n_pad), dtype=np.float32)
    for j, d in enumerate(deltas):
        for s in range(2):
            for i in range(n):
                src = slot_src[i, s]
                if src >= 0 and (i - src) == d:
                    masks[2 * j + s, i] = 1.0
    return deltas, masks


# ---------------------------------------------------------------------------
# Kernel
# ---------------------------------------------------------------------------
def make_neural_ca_kernel(state_n, iterations, deltas, roll_sign, n_pad):
    n_deltas = len(deltas)

    def kernel(t_ref, s_ref, m_ref, o_ref):
        # t_ref : SMEM (4*S*S,)   softmax(T)[{0,1,3,4}] flattened (c, k, t)
        # s_ref : VMEM (S, Np)    lane-major node states (nodes in lanes)
        # m_ref : VMEM (2*Dn, Np) per-(delta, slot) gather masks (graph-static)
        # o_ref : VMEM (S, Np)    next node states

        # Hoist loop-invariants out of the CA loop (scalar path / one-time reads).
        tv = [[[t_ref[(c * state_n + k) * state_n + t]
                for t in range(state_n)]
               for k in range(state_n)]
              for c in range(4)]
        slot_masks = [[m_ref[2 * j + s: 2 * j + s + 1, :] for s in range(2)]
                      for j in range(n_deltas)]

        def step(_, s_rows):
            row0 = s_rows[0]
            # flag = (first-occurrence argmax over state components > 0)
            #      = (max(s[1:]) > s[0])  -- pure element-wise VPU ops.
            if state_n > 1:
                m = s_rows[1]
                for k in range(2, state_n):
                    m = jnp.maximum(m, s_rows[k])
                flag = (m > row0).astype(jnp.float32)          # (1, Np)
            else:
                flag = jnp.zeros_like(row0)

            # Neighbour exchange: a_s[i] = flag[slot_src[i, s]] (0 if empty),
            # realised as masked lane rolls (XLU slot, O(N) per delta).
            a0 = jnp.zeros_like(flag)
            a1 = jnp.zeros_like(flag)
            for j, d in enumerate(deltas):
                shift = (roll_sign * d) % n_pad
                rolled = flag if shift == 0 else pltpu.roll(flag, shift, axis=1)
                a0 = a0 + slot_masks[j][0] * rolled            # rolled[i]=flag[i-d]
                a1 = a1 + slot_masks[j][1] * rolled

            # One-hot weights over the 4 reachable chars {0,1,3,4} (a0 + 3*a1).
            w = [(1.0 - a0) * (1.0 - a1),   # char 0
                 a0 * (1.0 - a1),           # char 1
                 (1.0 - a0) * a1,           # char 3
                 a0 * a1]                    # char 4

            # new_s[t] = sum_k s[k] * sum_c w[c] * T[char_c, k, t]  (VPU FMAs)
            new_rows = []
            for t in range(state_n):
                acc = None
                for k in range(state_n):
                    coeff = w[0] * tv[0][k][t]
                    for c in range(1, 4):
                        coeff = coeff + w[c] * tv[c][k][t]
                    term = s_rows[k] * coeff
                    acc = term if acc is None else acc + term
                new_rows.append(acc)
            return tuple(new_rows)

        init = tuple(s_ref[k:k + 1, :] for k in range(state_n))
        unroll = True if iterations <= 4 else 4
        final = lax.fori_loop(0, iterations, step, init, unroll=unroll)
        for k in range(state_n):
            o_ref[k:k + 1, :] = final[k]

    return kernel


# ---------------------------------------------------------------------------
# Wrapper (equivalent of NeuralCA.forward, logging disabled)
# ---------------------------------------------------------------------------
def neural_ca_forward(T, s0, edge_index, grid_size, iterations=1, hardmax=False):
    T = jnp.asarray(T, jnp.float32)
    char_n, state_n, _ = T.shape
    assert char_n >= 5, "base-3 encoding of 2 slots needs transitions T[0..4]"
    n = s0.shape[0]
    n_pad = ((n + 127) // 128) * 128        # lane-dense node padding

    deltas, masks_np = build_gather_tables(np.asarray(edge_index), n,
                                           grid_size, n_pad)

    if hardmax:
        t_eff = jax.nn.one_hot(jnp.argmax(T, axis=-1), state_n, dtype=jnp.float32)
    else:
        t_eff = jax.nn.softmax(T, axis=-1)
    # Only the 4 reachable chars {0,1,3,4} are kept (S, 4*S worth of scalars).
    t_flat = t_eff[jnp.array([0, 1, 3, 4])].reshape(-1)          # (4*S*S,)

    # lane-major, zero-padded state (padded lanes/rows stay exactly zero)
    s0_pad = jnp.zeros((state_n, n_pad), jnp.float32)
    s0_pad = s0_pad.at[:, :n].set(jnp.asarray(s0, jnp.float32).T)

    roll_sign = _detect_roll_sign()
    kernel = make_neural_ca_kernel(state_n, iterations, deltas, roll_sign, n_pad)

    # NOTE: no input_output_aliases — at these shapes the saved HBM buffer is
    # negligible and not donating keeps the wrapper-owned s0_pad reusable.
    call = pl.pallas_call(
        kernel,
        out_shape=jax.ShapeDtypeStruct((state_n, n_pad), jnp.float32),
        in_specs=[pl.BlockSpec(memory_space=pltpu.MemorySpace.SMEM),   # T scalars
                  pl.BlockSpec(memory_space=pltpu.MemorySpace.VMEM),   # state
                  pl.BlockSpec(memory_space=pltpu.MemorySpace.VMEM)],  # masks
        out_specs=pl.BlockSpec(memory_space=pltpu.MemorySpace.VMEM),
        cost_estimate=pl.CostEstimate(
            flops=iterations * n_pad * (10 * state_n * state_n
                                        + 8 * len(deltas) + 16),
            transcendentals=0,
            bytes_accessed=4 * (2 * state_n * n_pad + 2 * len(deltas) * n_pad
                                + 4 * state_n * state_n)),
    )
    out = call(t_flat, s0_pad, jnp.asarray(masks_np))
    return out[:, :n].T                                          # back to (N, S)


# ---------------------------------------------------------------------------
# Pure NumPy reference (transcription of the PyTorch forward, softmax path)
# ---------------------------------------------------------------------------
def reference_forward(T, s0, edge_index, grid_size, iterations=1):
    T = np.asarray(T, np.float32)
    s = np.asarray(s0, np.float32)
    ei = np.asarray(edge_index)
    Tm = T - T.max(-1, keepdims=True)
    Te = np.exp(Tm)
    Ts = Te / Te.sum(-1, keepdims=True)
    n = s.shape[0]
    for _ in range(iterations):
        inputs = s[ei[0]]
        index = ei[1]
        out = np.zeros((n, 2), np.float32)
        counts = np.zeros(n, dtype=np.int64)
        for i, idx in enumerate(index):
            a = np.argmax(inputs[i])
            if idx % grid_size == 0:
                out[idx, 1] = a
            elif idx % grid_size == grid_size - 1:
                out[idx, 0] = a
            else:
                out[idx, counts[idx]] = a
                counts[idx] += 1
        aggr = np.clip((out > 0.5).astype(np.float32), 0, 1)
        new_s = np.zeros_like(s)
        for i in range(n):
            num = int(aggr[i, 0] + 3 * aggr[i, 1])
            new_s[i] = s[i] @ Ts[num]
        s = new_s
    return s


if __name__ == "__main__":
    # base-3 encoding of 2 slots => CHAR_N must be 3**2 = 9 (as in the module)
    CHAR_N, STATE_N, GRID_SIZE = 9, 3, 8
    N = GRID_SIZE
    ITERATIONS = 3

    key = jax.random.PRNGKey(0)
    k_t, k_s = jax.random.split(key)
    T = jax.random.uniform(k_t, (CHAR_N, STATE_N, STATE_N), dtype=jnp.float32)
    classes = jax.random.randint(k_s, (N,), 0, STATE_N)
    s0 = jax.nn.one_hot(classes, STATE_N, dtype=jnp.float32)

    # 1-D CA line graph: interior nodes receive from left and right neighbours,
    # endpoints from their single neighbour.  edge (src -> dst).
    edges = []
    for i in range(N):
        if i - 1 >= 0:
            edges.append((i - 1, i))
        if i + 1 < N:
            edges.append((i + 1, i))
    edge_index = jnp.array(edges, dtype=jnp.int32).T          # (2, E), E = 2N - 2

    out = neural_ca_forward(T, s0, edge_index, GRID_SIZE, iterations=ITERATIONS)
    out = jax.block_until_ready(out)

    ref = reference_forward(np.asarray(T), np.asarray(s0), np.asarray(edge_index),
                            GRID_SIZE, iterations=ITERATIONS)
    assert out.shape == ref.shape
    assert np.allclose(np.asarray(out), ref, atol=1e-4, rtol=1e-4), "mismatch vs reference"
    print("KERNEL_OK")
</pallas_src>

<mosaic_0001>
module attributes {stable_mosaic.version = 11 : i64} {
  func.func @probe(%arg0: memref<1x128xf32, #tpu.memory_space<vmem>>, %arg1: memref<1x128xf32, #tpu.memory_space<vmem>>) attributes {dimension_semantics = [], scalar_prefetch = 0 : i64, scratch_operands = 0 : i64, tpu.core_type = #tpu.core_type<tc>} {
    %c0 = arith.constant 0 : index
    %c0_0 = arith.constant 0 : index
    %0 = vector.load %arg0[%c0, %c0_0] : memref<1x128xf32, #tpu.memory_space<vmem>>, vector<1x128xf32>
    %c1_i32 = arith.constant 1 : i32
    %1 = tpu.dynamic_rotate %0 by %c1_i32 dim 1 : vector<1x128xf32>, i32 -> vector<1x128xf32>
    %c0_1 = arith.constant 0 : index
    %c0_2 = arith.constant 0 : index
    %2 = vector.load %arg1[%c0_1, %c0_2] : memref<1x128xf32, #tpu.memory_space<vmem>>, vector<1x128xf32>
    tpu.vector_store %arg1[%c0_1, %c0_2], %1 {strides = array<i32>} : memref<1x128xf32, #tpu.memory_space<vmem>>, vector<1x128xf32>,
    return
  }
}

</mosaic_0001>

<llo_original>
// kernel: tpu_custom_call.1
$region0: #{tpu_custom_call.1}
  #allocation0 [shape = 'u32[]', space=smem, size = 0x4, offset = 0x4, fixed_abs, tag = 'smem constant byte address 0x4 - core index']
  #allocation1 [shape = 'u32[144,128]{1,0:T(1,128)}', space=vmem, size = 0x12000, scoped, tag = 'internal scratch']
  %s0 = inlined_call_operand.hbm [shape: f32[1,128], index: 0, kind: input, shape index: {}]
  %s1 = inlined_call_operand.hbm [shape: f32[1,128], index: 1, kind: output, shape index: {}]
  %s2 = sld [smem:[#allocation0]]
  $region18: #{tpu_custom_call.1} parent=0
    _
  %s4 = ssub.s32 1, %s2
  %s5 = scalar_select 0, %s4, %s2
  $region1: #{tpu_custom_call.1} parent=0
    #allocation2 [shape = 'u8[512]{0}', space=vmem, size = 0x400, scoped, tag = 'input window, operand 0, single buffered']
    #allocation3 [shape = 's32[1]{0}', space=sflag, size = 0x4, scoped, tag = 'scoped memory for tpu_custom_call.1']
    #allocation4 [shape = 's32[1]{0}', space=sflag, size = 0x4, scoped, tag = 'scoped memory for tpu_custom_call.1']
    #allocation5 [shape = 'u8[512]{0}', space=vmem, size = 0x400, scoped, tag = 'output window, operand 0, single buffered']
    %6 = vsyncpa [#allocation3], 0
    %7 = vsyncpa [#allocation4], 0
    // Predicated region
    $region2: #{tpu_custom_call.1} parent=1 // pred_check
      _
    $region3: #{tpu_custom_call.1} parent=1 // pred_check_branch
      %9 = sbr.rel (0) target = $region5
    $region4: #{tpu_custom_call.1} parent=1 // pred_region
      %s11 = ssub.s32 16, 16
      %12 = vsyncadd [#allocation3], %s11
      %s14 = sshll.u32 [#allocation2], 4
      %s15 = int_to_ptr.vmem [resolvable:$true] %s14
      %17 = dma.hbm_to_vmem [thread:$0]  %s0, 16, %s15, [#allocation3]
    $region5: #{tpu_custom_call.1} parent=1 // pred_fallthru
      _
    // Predicated region
    $region6: #{tpu_custom_call.1} parent=1 // pred_check
      _
    $region7: #{tpu_custom_call.1} parent=1 // pred_check_branch
      %19 = sbr.rel (0) target = $region9
    $region8: #{tpu_custom_call.1} parent=1 // pred_region
      %20 = dma.done [#allocation3], 16
    $region9: #{tpu_custom_call.1} parent=1 // pred_fallthru
      _
    %v21 = vld [vmem:[#allocation2] sm:$0x1]
    %22 = vrot.lane.b32.xlu0 %v21, 1
    %v23 = vpop.permute.xlu0 %22
    %24 = vst [vmem:[#allocation5] sm:$0x1] %v23
    // Predicated region
    $region10: #{tpu_custom_call.1} parent=1 // pred_check
      _
    $region11: #{tpu_custom_call.1} parent=1 // pred_check_branch
      %26 = sbr.rel (0) target = $region13
    $region12: #{tpu_custom_call.1} parent=1 // pred_region
      %s28 = ssub.s32 16, 16
      %29 = vsyncadd [#allocation4], %s28
      %s31 = sshll.u32 [#allocation5], 4
      %s32 = int_to_ptr.vmem [resolvable:$true] %s31
      %34 = dma.vmem_to_hbm [thread:$0]  %s32, 16, %s1, [#allocation4]
    $region13: #{tpu_custom_call.1} parent=1 // pred_fallthru
      _
    // Predicated region
    $region14: #{tpu_custom_call.1} parent=1 // pred_check
      _
    $region15: #{tpu_custom_call.1} parent=1 // pred_check_branch
      %36 = sbr.rel (0) target = $region17
    $region16: #{tpu_custom_call.1} parent=1 // pred_region
      %37 = dma.done [#allocation4], 16
    $region17: #{tpu_custom_call.1} parent=1 // pred_fallthru
      _
    %38 = vsyncpa [#allocation3], 1
    %39 = vsyncpa [#allocation4], 1

</llo_original>
